<compile_context>
chip_gen: v7x
topology: tpu7x:2x2x1
jax: 0.10.0
libtpu: 0.0.40
codegen_flags: <defaults>
</compile_context>

<pallas_src>
import functools

import jax
import jax.numpy as jnp
from jax.experimental import pallas as pl
from jax.experimental.pallas import tpu as pltpu

_LANE = 128


def _round_up(n, m):
    return -(-n // m) * m


def _num_tensorcores():
    """Megacore detection: 2 TCs per chip on v4 / v5p / v7x, else 1."""
    try:
        kind = jax.devices()[0].device_kind.lower()
        if ("v7" in kind) or ("v4" in kind) or ("v5p" in kind) or ("v5 p" in kind):
            return 2
    except Exception:
        pass
    return 1


_NUM_TC = _num_tensorcores()


# ----------------------------------------------------------------------------
# Kernel factory: whole MLP over one (D, N_tile) column slab.
#   refs = (x_ref, w1, b1, w2, b2, ..., wL, bL, o_ref)
#   wl : (out_l, in_l)  (PyTorch convention), bl : (out_l, 1)
# Matmuls hit the MXU (preferred_element_type=f32); tanh goes to the EUP.
# ----------------------------------------------------------------------------
def _make_mlp_kernel(num_layers):
    def kernel(*refs):
        x_ref = refs[0]
        o_ref = refs[-1]
        h = x_ref[...]                                   # (D, N_tile)
        for li in range(num_layers):
            w = refs[1 + 2 * li][...]                    # (out_l, in_l)
            b = refs[2 + 2 * li][...]                    # (out_l, 1)
            h = jnp.dot(w, h, preferred_element_type=jnp.float32) + b
            if li + 1 < num_layers:
                h = jnp.tanh(h)                          # hidden layers only
        o_ref[...] = h                                   # lane-dense full-width store
    return kernel


def _choose_tiling(N, bytes_per_col, *, target_tile_bytes, max_tile_cols,
                   num_tensorcores):
    """Pick (tile_cols, steps, n_pad) for the lane axis (N columns)."""
    n128 = _round_up(max(N, 1), _LANE)
    # Target ~target_tile_bytes of per-step x/activation/out traffic.
    tgt_cols = max(_LANE, (target_tile_bytes // max(bytes_per_col, 1)))
    tile_cols = min(n128, tgt_cols, max_tile_cols)
    tile_cols = max(_LANE, (tile_cols // _LANE) * _LANE)
    steps = -(-n128 // tile_cols)
    # Megacore: only shard across TCs when the total work is big enough to
    # amortize the extra per-step fixed cost (>= ~512 KiB of traffic per TC).
    if (num_tensorcores > 1 and steps < num_tensorcores
            and n128 * bytes_per_col >= num_tensorcores * (512 << 10)):
        steps = num_tensorcores
        tile_cols = _round_up(-(-n128 // steps), _LANE)
    n_pad = tile_cols * steps
    return tile_cols, steps, n_pad


def _poisson_sm_forward_impl(x, params, *, target_tile_bytes, max_tile_cols,
                             single_buffer_weights):
    """x: (B, S, D) float32 -> log_intensity: (B, S, output_dim) float32."""
    assert x.ndim == 3
    B, S, D = x.shape
    num_layers = len(params)
    out_dim = params[-1][0].shape[0]
    N = B * S

    dims = [D] + [w.shape[0] for (w, _) in params]
    # Per-column f32 traffic: x in + every activation + output.
    bytes_per_col = 4 * (D + sum(dims[1:]))
    tile_cols, steps, n_pad = _choose_tiling(
        N, bytes_per_col, target_tile_bytes=target_tile_bytes,
        max_tile_cols=max_tile_cols, num_tensorcores=_NUM_TC)

    # Lane-dense layout: N rides the 128-lane axis.  Under jit the reshape/
    # transpose/pad below fuse into a single copy (review item: no extra HBM
    # pass for the transpose).
    x_t = x.reshape(N, D).astype(jnp.float32).T              # (D, N)
    if n_pad != N:
        x_t = jnp.pad(x_t, ((0, 0), (0, n_pad - N)))         # padded cols sliced off

    # Weights in PyTorch (out, in) convention; biases as (out, 1) columns.
    flat_args = [x_t]
    for (w, b) in params:
        flat_args.append(w.astype(jnp.float32))
        flat_args.append(b.reshape(-1, 1).astype(jnp.float32))

    param_bytes = 4 * sum(int(w.size) + int(b.size) for (w, b) in params)
    if single_buffer_weights is None:
        # Auto: dropping the second buffer only matters once double-buffered
        # params start pressuring VMEM (v7x: 64 MiB physical / 32 MiB scoped).
        single_buffer_weights = (2 * param_bytes) > (2 << 20)

    def resident_spec(arr):
        # Constant index_map: block == full array, DMA'd once, VMEM-resident.
        nd = arr.ndim
        if single_buffer_weights:
            return pl.BlockSpec(arr.shape, lambda i, _nd=nd: (0,) * _nd,
                                pipeline_mode=pl.Buffered(1))
        return pl.BlockSpec(arr.shape, lambda i, _nd=nd: (0,) * _nd)

    in_specs = [pl.BlockSpec((D, tile_cols), lambda i: (0, i))]
    in_specs += [resident_spec(a) for a in flat_args[1:]]
    out_spec = pl.BlockSpec((out_dim, tile_cols), lambda i: (0, i))

    # ---- advisory cost estimate so XLA schedules the custom call sensibly ----
    flops = 2 * n_pad * sum(a * b for a, b in zip(dims[:-1], dims[1:]))
    transcendentals = n_pad * sum(dims[1:-1])
    bytes_accessed = 4 * n_pad * (D + out_dim) + param_bytes
    cost = pl.CostEstimate(flops=int(flops),
                           transcendentals=int(transcendentals),
                           bytes_accessed=int(bytes_accessed))

    # ---- tight VMEM budget: ~4x working set with a 4 MiB floor ---------------
    io_bytes = 4 * tile_cols * (D + out_dim)                  # x + out tile
    act_bytes = 4 * tile_cols * sum(dims[1:])                 # intermediate h's
    weight_bufs = 1 if single_buffer_weights else 2
    vmem_needed = 2 * io_bytes + weight_bufs * param_bytes + act_bytes
    vmem_limit = int(min(max(4 * vmem_needed, 4 << 20), 64 << 20))

    out_t = pl.pallas_call(
        _make_mlp_kernel(num_layers),
        out_shape=jax.ShapeDtypeStruct((out_dim, n_pad), jnp.float32),
        grid_spec=pltpu.PrefetchScalarGridSpec(
            num_scalar_prefetch=0,
            grid=(steps,),
            in_specs=in_specs,
            out_specs=out_spec,
        ),
        compiler_params=pltpu.CompilerParams(
            dimension_semantics=("parallel",),
            vmem_limit_bytes=vmem_limit,
        ),
        cost_estimate=cost,
    )(*flat_args)

    out2d = out_t[:, :N].T                                    # drop padded columns
    return out2d.reshape(B, S, out_dim)


# Whole host path (layout plumbing + pallas_call + un-plumbing) in one jit.
poisson_sm_forward = jax.jit(
    functools.partial(_poisson_sm_forward_impl),
    static_argnames=("target_tile_bytes", "max_tile_cols",
                     "single_buffer_weights"))


def forward(x, params, *, target_tile_bytes=2 << 20, max_tile_cols=8192,
            single_buffer_weights=None):
    return poisson_sm_forward(x, params,
                              target_tile_bytes=target_tile_bytes,
                              max_tile_cols=max_tile_cols,
                              single_buffer_weights=single_buffer_weights)


# ----------------------------------------------------------------------------
# Deterministic parameter init mirroring Poisson_SM.__init__:
# kaiming_uniform_(nonlinearity='tanh') for weights (PyTorch (out, in) layout),
# default nn.Linear uniform(-1/sqrt(fan_in), 1/sqrt(fan_in)) for biases.
# ----------------------------------------------------------------------------
def init_params(key, input_dim, hidden_dims, output_dim=1):
    dims = [input_dim] + list(hidden_dims) + [output_dim]
    params = []
    gain = 5.0 / 3.0  # torch gain for tanh
    for fan_in, fan_out in zip(dims[:-1], dims[1:]):
        key, kw, kb = jax.random.split(key, 3)
        w_bound = gain * (3.0 / fan_in) ** 0.5
        b_bound = (1.0 / fan_in) ** 0.5
        w = jax.random.uniform(kw, (fan_out, fan_in), jnp.float32,
                               minval=-w_bound, maxval=w_bound)
        b = jax.random.uniform(kb, (fan_out,), jnp.float32,
                               minval=-b_bound, maxval=b_bound)
        params.append((w, b))
    return params


# Pure-JAX reference (PyTorch semantics: y = x @ W.T + b) for correctness.
def reference_forward(x, params):
    h = x
    for i, (w, b) in enumerate(params):
        h = h @ w.T + b
        if i + 1 < len(params):
            h = jnp.tanh(h)
    return h


if __name__ == "__main__":
    # Small shapes consistent with the module: a batch of event sequences of
    # input_dim-dimensional points.  N = 4*250 = 1000 is deliberately not a
    # multiple of 128 to exercise the pad-and-slice path (one 1024-column
    # step on single-TC chips; megacore split only kicks in for large N).
    batch, seq, input_dim = 4, 250, 4
    hidden_dims = (32, 32)
    output_dim = 1

    key = jax.random.PRNGKey(0)
    x = jax.random.normal(key, (batch, seq, input_dim), dtype=jnp.float32)

    params = init_params(jax.random.PRNGKey(123), input_dim, hidden_dims,
                         output_dim)

    log_intensity = jax.block_until_ready(forward(x, params))

    ref = reference_forward(x, params)
    assert log_intensity.shape == (batch, seq, output_dim)
    assert jnp.allclose(log_intensity, ref, atol=1e-5, rtol=1e-5), (
        float(jnp.max(jnp.abs(log_intensity - ref))))

    # TODO(synk): compute_psi / loss require autodiff through the kernel
    # (input gradients + divergence terms); only the forward pass is kernelized.
    print("KERNEL_OK")
</pallas_src>

<mosaic_0001>
module attributes {stable_mosaic.version = 11 : i64} {
  func.func @kernel(%arg0: i32, %arg1: memref<4x1024xf32, #tpu.memory_space<vmem>>, %arg2: memref<32x4xf32, #tpu.memory_space<vmem>>, %arg3: memref<32x1xf32, #tpu.memory_space<vmem>>, %arg4: memref<32x32xf32, #tpu.memory_space<vmem>>, %arg5: memref<32x1xf32, #tpu.memory_space<vmem>>, %arg6: memref<1x32xf32, #tpu.memory_space<vmem>>, %arg7: memref<1x1xf32, #tpu.memory_space<vmem>>, %arg8: memref<1x1024xf32, #tpu.memory_space<vmem>>) attributes {dimension_semantics = [#tpu.dimension_semantics<parallel>], iteration_bounds = array<i64: 1>, scalar_prefetch = 0 : i64, scratch_operands = 0 : i64, tpu.core_type = #tpu.core_type<tc>, window_params = [{transform_indices = @transform_0, window_bounds = array<i64: 4, 1024>}, {pipeline_mode = #tpu.pipeline_mode<synchronous>, transform_indices = @transform_1, window_bounds = array<i64: 32, 4>}, {pipeline_mode = #tpu.pipeline_mode<synchronous>, transform_indices = @transform_2, window_bounds = array<i64: 32, 1>}, {pipeline_mode = #tpu.pipeline_mode<synchronous>, transform_indices = @transform_3, window_bounds = array<i64: 32, 32>}, {pipeline_mode = #tpu.pipeline_mode<synchronous>, transform_indices = @transform_4, window_bounds = array<i64: 32, 1>}, {pipeline_mode = #tpu.pipeline_mode<synchronous>, transform_indices = @transform_5, window_bounds = array<i64: 1, 32>}, {pipeline_mode = #tpu.pipeline_mode<synchronous>, transform_indices = @transform_6, window_bounds = array<i64: 1, 1>}, {transform_indices = @transform_7, window_bounds = array<i64: 1, 1024>}]} {
    %c0 = arith.constant 0 : index
    %c0_0 = arith.constant 0 : index
    %0 = vector.load %arg1[%c0, %c0_0] : memref<4x1024xf32, #tpu.memory_space<vmem>>, vector<4x1024xf32>
    %c0_1 = arith.constant 0 : index
    %c0_2 = arith.constant 0 : index
    %1 = vector.load %arg2[%c0_1, %c0_2] : memref<32x4xf32, #tpu.memory_space<vmem>>, vector<32x4xf32>
    %c0_3 = arith.constant 0 : index
    %c0_4 = arith.constant 0 : index
    %2 = vector.load %arg3[%c0_3, %c0_4] : memref<32x1xf32, #tpu.memory_space<vmem>>, vector<32x1xf32>
    %cst = arith.constant dense<0.000000e+00> : vector<32x1024xf32>
    %3 = tpu.matmul %1, %0, %cst {dimension_numbers = #tpu.dot_dimension_numbers<[1], [0], [0], [1], [0, 0, 1, 1], [], []>} : vector<32x4xf32>, vector<4x1024xf32>, vector<32x1024xf32> -> vector<32x1024xf32>
    %4 = vector.broadcast %2 : vector<32x1xf32> to vector<32x1024xf32>
    %5 = arith.addf %3, %4 : vector<32x1024xf32>
    %6 = math.tanh %5 : vector<32x1024xf32>
    %c0_5 = arith.constant 0 : index
    %c0_6 = arith.constant 0 : index
    %7 = vector.load %arg4[%c0_5, %c0_6] : memref<32x32xf32, #tpu.memory_space<vmem>>, vector<32x32xf32>
    %c0_7 = arith.constant 0 : index
    %c0_8 = arith.constant 0 : index
    %8 = vector.load %arg5[%c0_7, %c0_8] : memref<32x1xf32, #tpu.memory_space<vmem>>, vector<32x1xf32>
    %cst_9 = arith.constant dense<0.000000e+00> : vector<32x1024xf32>
    %9 = tpu.matmul %7, %6, %cst_9 {dimension_numbers = #tpu.dot_dimension_numbers<[1], [0], [0], [1], [0, 0, 1, 1], [], []>} : vector<32x32xf32>, vector<32x1024xf32>, vector<32x1024xf32> -> vector<32x1024xf32>
    %10 = vector.broadcast %8 : vector<32x1xf32> to vector<32x1024xf32>
    %11 = arith.addf %9, %10 : vector<32x1024xf32>
    %12 = math.tanh %11 : vector<32x1024xf32>
    %c0_10 = arith.constant 0 : index
    %c0_11 = arith.constant 0 : index
    %13 = vector.load %arg6[%c0_10, %c0_11] : memref<1x32xf32, #tpu.memory_space<vmem>>, vector<1x32xf32>
    %c0_12 = arith.constant 0 : index
    %c0_13 = arith.constant 0 : index
    %14 = vector.load %arg7[%c0_12, %c0_13] : memref<1x1xf32, #tpu.memory_space<vmem>>, vector<1x1xf32>
    %cst_14 = arith.constant dense<0.000000e+00> : vector<1x1024xf32>
    %15 = tpu.matmul %13, %12, %cst_14 {dimension_numbers = #tpu.dot_dimension_numbers<[1], [0], [0], [1], [0, 0, 1, 1], [], []>} : vector<1x32xf32>, vector<32x1024xf32>, vector<1x1024xf32> -> vector<1x1024xf32>
    %16 = vector.broadcast %14 : vector<1x1xf32> to vector<1x1024xf32>
    %17 = arith.addf %15, %16 : vector<1x1024xf32>
    %c0_15 = arith.constant 0 : index
    %c0_16 = arith.constant 0 : index
    %18 = vector.load %arg8[%c0_15, %c0_16] : memref<1x1024xf32, #tpu.memory_space<vmem>>, vector<1x1024xf32>
    tpu.vector_store %arg8[%c0_15, %c0_16], %17 {strides = array<i32>} : memref<1x1024xf32, #tpu.memory_space<vmem>>, vector<1x1024xf32>,
    return
  }
  func.func @transform_0(%arg0: i32) -> (i32, i32) {
    %c0_i32 = arith.constant 0 : i32
    %c0_i32_0 = arith.constant 0 : i32
    return %c0_i32, %arg0 : i32, i32
  }
  func.func @transform_1(%arg0: i32) -> (i32, i32) {
    %c0_i32 = arith.constant 0 : i32
    %c0_i32_0 = arith.constant 0 : i32
    %c0_i32_1 = arith.constant 0 : i32
    return %c0_i32, %c0_i32_0 : i32, i32
  }
  func.func @transform_2(%arg0: i32) -> (i32, i32) {
    %c0_i32 = arith.constant 0 : i32
    %c0_i32_0 = arith.constant 0 : i32
    %c0_i32_1 = arith.constant 0 : i32
    return %c0_i32, %c0_i32_0 : i32, i32
  }
  func.func @transform_3(%arg0: i32) -> (i32, i32) {
    %c0_i32 = arith.constant 0 : i32
    %c0_i32_0 = arith.constant 0 : i32
    %c0_i32_1 = arith.constant 0 : i32
    return %c0_i32, %c0_i32_0 : i32, i32
  }
  func.func @transform_4(%arg0: i32) -> (i32, i32) {
    %c0_i32 = arith.constant 0 : i32
    %c0_i32_0 = arith.constant 0 : i32
    %c0_i32_1 = arith.constant 0 : i32
    return %c0_i32, %c0_i32_0 : i32, i32
  }
  func.func @transform_5(%arg0: i32) -> (i32, i32) {
    %c0_i32 = arith.constant 0 : i32
    %c0_i32_0 = arith.constant 0 : i32
    %c0_i32_1 = arith.constant 0 : i32
    return %c0_i32, %c0_i32_0 : i32, i32
  }
  func.func @transform_6(%arg0: i32) -> (i32, i32) {
    %c0_i32 = arith.constant 0 : i32
    %c0_i32_0 = arith.constant 0 : i32
    %c0_i32_1 = arith.constant 0 : i32
    return %c0_i32, %c0_i32_0 : i32, i32
  }
  func.func @transform_7(%arg0: i32) -> (i32, i32) {
    %c0_i32 = arith.constant 0 : i32
    %c0_i32_0 = arith.constant 0 : i32
    return %c0_i32, %arg0 : i32, i32
  }
}

</mosaic_0001>

<llo_original>
// kernel: _poisson_sm_forward_impl.1
$region0: #{_poisson_sm_forward_impl.1}
  #allocation0 [shape = 'u32[]', space=smem, size = 0x4, offset = 0x4, fixed_abs, tag = 'smem constant byte address 0x4 - core index']
  #allocation1 [shape = 'u32[144,128]{1,0:T(1,128)}', space=vmem, size = 0x12000, scoped, tag = 'internal scratch']
  #allocation2 [shape = 'f32[1,1]{1,0:T(1,128)S(1)}', space=vmem, size = 0x200, scoped, tag = 'scoped memory for _poisson_sm_forward_impl.1']
  %s0 = inlined_call_operand.vmem [shape: f32[4,1024], index: 0, kind: input, shape index: {}]
  %s1 = inlined_call_operand.vmem [shape: f32[32,4], index: 1, kind: input, shape index: {}]
  %s2 = inlined_call_operand.vmem [shape: f32[32,1], index: 2, kind: input, shape index: {}]
  %s3 = inlined_call_operand.vmem [shape: f32[32,32], index: 3, kind: input, shape index: {}]
  %s4 = inlined_call_operand.vmem [shape: f32[32,1], index: 4, kind: input, shape index: {}]
  %s5 = inlined_call_operand.vmem [shape: f32[1,32], index: 5, kind: input, shape index: {}]
  %s6 = inlined_call_operand.<no memory space> [shape: f32[1,1], index: 6, kind: input, shape index: {}]
  %s7 = inlined_call_operand.vmem [shape: f32[1,1024], index: 7, kind: output, shape index: {}]
  %s8 = sld [smem:[#allocation0]]
  $region38: #{_poisson_sm_forward_impl.1} parent=0
    _
  %s10 = ssub.s32 1, %s8
  %s11 = scalar_select 0, %s10, %s8
  %v12 = vstv %s6
  %13 = vst [vmem:[#allocation2] sm:$0x1] %v12
  // Predicated region
  $region2: #{_poisson_sm_forward_impl.1} parent=0 // pred_check
    _
  $region3: #{_poisson_sm_forward_impl.1} parent=0 // pred_check_branch
    %15 = sbr.rel (0) target = $region5
  $region4: #{_poisson_sm_forward_impl.1} parent=0 // pred_region
    _
  $region5: #{_poisson_sm_forward_impl.1} parent=0 // pred_fallthru
    _
  // Predicated region
  $region6: #{_poisson_sm_forward_impl.1} parent=0 // pred_check
    _
  $region7: #{_poisson_sm_forward_impl.1} parent=0 // pred_check_branch
    %17 = sbr.rel (0) target = $region9
  $region8: #{_poisson_sm_forward_impl.1} parent=0 // pred_region
    _
  $region9: #{_poisson_sm_forward_impl.1} parent=0 // pred_fallthru
    _
  // Predicated region
  $region10: #{_poisson_sm_forward_impl.1} parent=0 // pred_check
    _
  $region11: #{_poisson_sm_forward_impl.1} parent=0 // pred_check_branch
    %19 = sbr.rel (0) target = $region13
  $region12: #{_poisson_sm_forward_impl.1} parent=0 // pred_region
    _
  $region13: #{_poisson_sm_forward_impl.1} parent=0 // pred_fallthru
    _
  // Predicated region
  $region14: #{_poisson_sm_forward_impl.1} parent=0 // pred_check
    _
  $region15: #{_poisson_sm_forward_impl.1} parent=0 // pred_check_branch
    %21 = sbr.rel (0) target = $region17
  $region16: #{_poisson_sm_forward_impl.1} parent=0 // pred_region
    _
  $region17: #{_poisson_sm_forward_impl.1} parent=0 // pred_fallthru
    _
  // Predicated region
  $region18: #{_poisson_sm_forward_impl.1} parent=0 // pred_check
    _
  $region19: #{_poisson_sm_forward_impl.1} parent=0 // pred_check_branch
    %23 = sbr.rel (0) target = $region21
  $region20: #{_poisson_sm_forward_impl.1} parent=0 // pred_region
    _
  $region21: #{_poisson_sm_forward_impl.1} parent=0 // pred_fallthru
    _
  // Predicated region
  $region22: #{_poisson_sm_forward_impl.1} parent=0 // pred_check
    _
  $region23: #{_poisson_sm_forward_impl.1} parent=0 // pred_check_branch
    %25 = sbr.rel (0) target = $region25
  $region24: #{_poisson_sm_forward_impl.1} parent=0 // pred_region
    _
  $region25: #{_poisson_sm_forward_impl.1} parent=0 // pred_fallthru
    _
  // Predicated region
  $region26: #{_poisson_sm_forward_impl.1} parent=0 // pred_check
    _
  $region27: #{_poisson_sm_forward_impl.1} parent=0 // pred_check_branch
    %27 = sbr.rel (0) target = $region29
  $region28: #{_poisson_sm_forward_impl.1} parent=0 // pred_region
    _
  $region29: #{_poisson_sm_forward_impl.1} parent=0 // pred_fallthru
    _
  %v28 = vld [vmem:[%s0] sm:$0xff]
  %v29 = vld [vmem:[%s0 + $0x8] sm:$0xff]
  %v30 = vld [vmem:[%s0 + $0x10] sm:$0xff]
  %v31 = vld [vmem:[%s0 + $0x18] sm:$0xff]
  %v32 = vld [vmem:[%s1] sm:$0xff]
  %v33 = vld [vmem:[%s1 + $0x8] sm:$0xff]
  %v34 = vld [vmem:[%s1 + $0x10] sm:$0xff]
  %v35 = vld [vmem:[%s1 + $0x18] sm:$0xff]
  %v36 = vld [vmem:[%s2] sm:$0xff]
  %v37 = vld [vmem:[%s2 + $0x8] sm:$0xff]
  %v38 = vld [vmem:[%s2 + $0x10] sm:$0xff]
  %v39 = vld [vmem:[%s2 + $0x18] sm:$0xff]
  %41 = vset.pattern.permute.xlu0 0
  %42 = vperm.xlu0 %41, %v36
  %v43 = vpop.permute.xlu0 %42
  %46 = vset.pattern.permute.xlu0 0
  %47 = vperm.xlu0 %46, %v37
  %v48 = vpop.permute.xlu0 %47
  %51 = vset.pattern.permute.xlu0 0
  %52 = vperm.xlu0 %51, %v38
  %v53 = vpop.permute.xlu0 %52
  %56 = vset.pattern.permute.xlu0 0
  %57 = vperm.xlu0 %56, %v39
  %v58 = vpop.permute.xlu0 %57
  %v64 = vcombine.high %v28, %v28
  %v65 = vcombine.high %v29, %v29
  %v66 = vcombine.high %v30, %v30
  %v67 = vcombine.high %v31, %v31
  %vm68 = vcmask 31744
  %v70 = vsel %vm68, %v32, 0
  %v73 = vsel %vm68, %v33, 0
  %v76 = vsel %vm68, %v34, 0
  %v79 = vsel %vm68, %v35, 0
  %vm81 = vcmask 1043456
  %v82 = vsel %vm81, %v28, 0
  %v84 = vsel %vm81, %v64, 0
  %v86 = vsel %vm81, %v29, 0
  %v88 = vsel %vm81, %v65, 0
  %v90 = vsel %vm81, %v30, 0
  %v92 = vsel %vm81, %v66, 0
  %v94 = vsel %vm81, %v31, 0
  %v96 = vsel %vm81, %v67, 0
  %98 = vmatprep.subr.mxu0 %v84
  %99 = vmatpush1.msra.mxu0 %v82
  %100 = vmatprep.subr.mxu0 0.0
  %101 = vmatpush1.msra.mxu0 0.0
  %102 = vmatprep.subr.mxu0 0.0
  %103 = vmatpush1.msra.mxu0 0.0
  %104 = vmatprep.subr.mxu0 0.0
  %105 = vmatpush1.msra.mxu0 0.0
  %106 = vmatprep.subr.mxu0 0.0
  %107 = vmatpush1.msra.mxu0 0.0
  %108 = vmatprep.subr.mxu0 0.0
  %109 = vmatpush1.msra.mxu0 0.0
  %110 = vmatprep.subr.mxu0 0.0
  %111 = vmatpush1.msra.mxu0 0.0
  %112 = vmatprep.subr.mxu0 0.0
  %113 = vmatpush1.msra.mxu0 0.0
  %114 = vmatprep.subr.mxu0 0.0
  %115 = vmatpush1.msra.mxu0 0.0
  %116 = vmatprep.subr.mxu0 0.0
  %117 = vmatpush1.msra.mxu0 0.0
  %118 = vmatprep.subr.mxu0 0.0
  %119 = vmatpush1.msra.mxu0 0.0
  %120 = vmatprep.subr.mxu0 0.0
  %121 = vmatpush1.msra.mxu0 0.0
  %122 = vmatprep.subr.mxu0 0.0
  %123 = vmatpush1.msra.mxu0 0.0
  %124 = vmatprep.subr.mxu0 0.0
  %125 = vmatpush1.msra.mxu0 0.0
  %126 = vmatprep.subr.mxu0 0.0
  %127 = vmatpush1.msra.mxu0 0.0
  %128 = vmatprep.subr.mxu0 0.0
  %129 = vmatpush1.msra.mxu0 0.0
  %130 = vmatprep.subr.mxu0 0.0
  %131 = vmatpush1.msra.mxu0 0.0
  %132 = vmatprep.subr.mxu0 0.0
  %133 = vmatpush1.msra.mxu0 0.0
  %134 = vmatprep.subr.mxu0 0.0
  %135 = vmatpush1.msra.mxu0 0.0
  %136 = vmatprep.subr.mxu0 0.0
  %137 = vmatpush1.msra.mxu0 0.0
  %138 = vmatprep.subr.mxu0 0.0
  %139 = vmatpush1.msra.mxu0 0.0
  %140 = vmatprep.subr.mxu0 0.0
  %141 = vmatpush1.msra.mxu0 0.0
  %142 = vmatprep.subr.mxu0 0.0
  %143 = vmatpush1.msra.mxu0 0.0
  %144 = vmatprep.subr.mxu0 0.0
  %145 = vmatpush1.msra.mxu0 0.0
  %146 = vmatprep.subr.mxu0 0.0
  %147 = vmatpush1.msra.mxu0 0.0
  %148 = vmatprep.subr.mxu0 0.0
  %149 = vmatpush1.msra.mxu0 0.0
  %150 = vmatprep.subr.mxu0 0.0
  %151 = vmatpush1.msra.mxu0 0.0
  %152 = vmatprep.subr.mxu0 0.0
  %153 = vmatpush1.msra.mxu0 0.0
  %154 = vmatprep.subr.mxu0 0.0
  %155 = vmatpush1.msra.mxu0 0.0
  %156 = vmatprep.subr.mxu0 0.0
  %157 = vmatpush1.msra.mxu0 0.0
  %158 = vmatprep.subr.mxu0 0.0
  %159 = vmatpush1.msra.mxu0 0.0
  %160 = vmatprep.subr.mxu0 0.0
  %161 = vmatpush1.msra.mxu0 0.0
  %162 = vmatprep.mubr.f32.mxu0 0.0
  %163 = vmatmul.mubr.f32.gmra.mrb[0].mxu0 %v70
  %v164 = vpop.f32.mrb[0].mxu0
  %v165 = vadd.f32 %v43, %v164
  %v166 = vpop.f32.mrb[0].mxu0
  %v167 = vadd.f32 %v43, %v166
  %168 = vmatprep.mubr.f32.mxu0 0.0
  %169 = vmatmul.mubr.f32.gmra.mrb[0].mxu0 %v73
  %v170 = vpop.f32.mrb[0].mxu0
  %v171 = vadd.f32 %v48, %v170
  %v172 = vpop.f32.mrb[0].mxu0
  %v173 = vadd.f32 %v48, %v172
  %174 = vmatprep.mubr.f32.mxu0 0.0
  %175 = vmatmul.mubr.f32.gmra.mrb[0].mxu0 %v76
  %v176 = vpop.f32.mrb[0].mxu0
  %v177 = vadd.f32 %v53, %v176
  %v178 = vpop.f32.mrb[0].mxu0
  %v179 = vadd.f32 %v53, %v178
  %180 = vmatprep.mubr.f32.mxu0 0.0
  %181 = vmatmul.mubr.f32.gmra.mrb[0].mxu0 %v79
  %v182 = vpop.f32.mrb[0].mxu0
  %v183 = vadd.f32 %v58, %v182
  %v184 = vpop.f32.mrb[0].mxu0
  %v185 = vadd.f32 %v58, %v184
  %186 = vdwg.mxu0
  %187 = vmatprep.subr.mxu0 %v88
  %188 = vmatpush1.msra.mxu0 %v86
  %189 = vmatprep.subr.mxu0 0.0
  %190 = vmatpush1.msra.mxu0 0.0
  %191 = vmatprep.subr.mxu0 0.0
  %192 = vmatpush1.msra.mxu0 0.0
  %193 = vmatprep.subr.mxu0 0.0
  %194 = vmatpush1.msra.mxu0 0.0
  %195 = vmatprep.subr.mxu0 0.0
  %196 = vmatpush1.msra.mxu0 0.0
  %197 = vmatprep.subr.mxu0 0.0
  %198 = vmatpush1.msra.mxu0 0.0
  %199 = vmatprep.subr.mxu0 0.0
  %200 = vmatpush1.msra.mxu0 0.0
  %201 = vmatprep.subr.mxu0 0.0
  %202 = vmatpush1.msra.mxu0 0.0
  %203 = vmatprep.subr.mxu0 0.0
  %204 = vmatpush1.msra.mxu0 0.0
  %205 = vmatprep.subr.mxu0 0.0
  %206 = vmatpush1.msra.mxu0 0.0
  %207 = vmatprep.subr.mxu0 0.0
  %208 = vmatpush1.msra.mxu0 0.0
  %209 = vmatprep.subr.mxu0 0.0
  %210 = vmatpush1.msra.mxu0 0.0
  %211 = vmatprep.subr.mxu0 0.0
  %212 = vmatpush1.msra.mxu0 0.0
  %213 = vmatprep.subr.mxu0 0.0
  %214 = vmatpush1.msra.mxu0 0.0
  %215 = vmatprep.subr.mxu0 0.0
  %216 = vmatpush1.msra.mxu0 0.0
  %217 = vmatprep.subr.mxu0 0.0
  %218 = vmatpush1.msra.mxu0 0.0
  %219 = vmatprep.subr.mxu0 0.0
  %220 = vmatpush1.msra.mxu0 0.0
  %221 = vmatprep.subr.mxu0 0.0
  %222 = vmatpush1.msra.mxu0 0.0
  %223 = vmatprep.subr.mxu0 0.0
  %224 = vmatpush1.msra.mxu0 0.0
  %225 = vmatprep.subr.mxu0 0.0
  %226 = vmatpush1.msra.mxu0 0.0
  %227 = vmatprep.subr.mxu0 0.0
  %228 = vmatpush1.msra.mxu0 0.0
  %229 = vmatprep.subr.mxu0 0.0
  %230 = vmatpush1.msra.mxu0 0.0
  %231 = vmatprep.subr.mxu0 0.0
  %232 = vmatpush1.msra.mxu0 0.0
  %233 = vmatprep.subr.mxu0 0.0
  %234 = vmatpush1.msra.mxu0 0.0
  %235 = vmatprep.subr.mxu0 0.0
  %236 = vmatpush1.msra.mxu0 0.0
  %237 = vmatprep.subr.mxu0 0.0
  %238 = vmatpush1.msra.mxu0 0.0
  %239 = vmatprep.subr.mxu0 0.0
  %240 = vmatpush1.msra.mxu0 0.0
  %241 = vmatprep.subr.mxu0 0.0
  %242 = vmatpush1.msra.mxu0 0.0
  %243 = vmatprep.subr.mxu0 0.0
  %244 = vmatpush1.msra.mxu0 0.0
  %245 = vmatprep.subr.mxu0 0.0
  %246 = vmatpush1.msra.mxu0 0.0
  %247 = vmatprep.subr.mxu0 0.0
  %248 = vmatpush1.msra.mxu0 0.0
  %249 = vmatprep.subr.mxu0 0.0
  %250 = vmatpush1.msra.mxu0 0.0
  %251 = vmatprep.mubr.f32.mxu0 0.0
  %252 = vmatmul.mubr.f32.gmra.mrb[0].mxu0 %v70
  %v253 = vpop.f32.mrb[0].mxu0
  %v254 = vadd.f32 %v43, %v253
  %v255 = vpop.f32.mrb[0].mxu0
  %v256 = vadd.f32 %v43, %v255
  %257 = vmatprep.mubr.f32.mxu0 0.0
  %258 = vmatmul.mubr.f32.gmra.mrb[0].mxu0 %v73
  %v259 = vpop.f32.mrb[0].mxu0
  %v260 = vadd.f32 %v48, %v259
  %v261 = vpop.f32.mrb[0].mxu0
  %v262 = vadd.f32 %v48, %v261
  %263 = vmatprep.mubr.f32.mxu0 0.0
  %264 = vmatmul.mubr.f32.gmra.mrb[0].mxu0 %v76
  %v265 = vpop.f32.mrb[0].mxu0
  %v266 = vadd.f32 %v53, %v265
  %v267 = vpop.f32.mrb[0].mxu0
  %v268 = vadd.f32 %v53, %v267
  %269 = vmatprep.mubr.f32.mxu0 0.0
  %270 = vmatmul.mubr.f32.gmra.mrb[0].mxu0 %v79
  %v271 = vpop.f32.mrb[0].mxu0
  %v272 = vadd.f32 %v58, %v271
  %v273 = vpop.f32.mrb[0].mxu0
  %v274 = vadd.f32 %v58, %v273
  %275 = vdwg.mxu0
  %276 = vmatprep.subr.mxu0 %v92
  %277 = vmatpush1.msra.mxu0 %v90
  %278 = vmatprep.subr.mxu0 0.0
  %279 = vmatpush1.msra.mxu0 0.0
  %280 = vmatprep.subr.mxu0 0.0
  %281 = vmatpush1.msra.mxu0 0.0
  %282 = vmatprep.subr.mxu0 0.0
  %283 = vmatpush1.msra.mxu0 0.0
  %284 = vmatprep.subr.mxu0 0.0
  %285 = vmatpush1.msra.mxu0 0.0
  %286 = vmatprep.subr.mxu0 0.0
  %287 = vmatpush1.msra.mxu0 0.0
  %288 = vmatprep.subr.mxu0 0.0
  %289 = vmatpush1.msra.mxu0 0.0
  %290 = vmatprep.subr.mxu0 0.0
  %291 = vmatpush1.msra.mxu0 0.0
  %292 = vmatprep.subr.mxu0 0.0
  %293 = vmatpush1.msra.mxu0 0.0
  %294 = vmatprep.subr.mxu0 0.0
  %295 = vmatpush1.msra.mxu0 0.0
  %296 = vmatprep.subr.mxu0 0.0
  %297 = vmatpush1.msra.mxu0 0.0
  %298 = vmatprep.subr.mxu0 0.0
  %299 = vmatpush1.msra.mxu0 0.0
  %300 = vmatprep.subr.mxu0 0.0
  %301 = vmatpush1.msra.mxu0 0.0
  %302 = vmatprep.subr.mxu0 0.0
  %303 = vmatpush1.msra.mxu0 0.0
  %304 = vmatprep.subr.mxu0 0.0
  %305 = vmatpush1.msra.mxu0 0.0
  %306 = vmatprep.subr.mxu0 0.0
  %307 = vmatpush1.msra.mxu0 0.0
  %308 = vmatprep.subr.mxu0 0.0
  %309 = vmatpush1.msra.mxu0 0.0
  %310 = vmatprep.subr.mxu0 0.0
  %311 = vmatpush1.msra.mxu0 0.0
  %312 = vmatprep.subr.mxu0 0.0
  %313 = vmatpush1.msra.mxu0 0.0
  %314 = vmatprep.subr.mxu0 0.0
  %315 = vmatpush1.msra.mxu0 0.0
  %316 = vmatprep.subr.mxu0 0.0
  %317 = vmatpush1.msra.mxu0 0.0
  %318 = vmatprep.subr.mxu0 0.0
  %319 = vmatpush1.msra.mxu0 0.0
  %320 = vmatprep.subr.mxu0 0.0
  %321 = vmatpush1.msra.mxu0 0.0
  %322 = vmatprep.subr.mxu0 0.0
  %323 = vmatpush1.msra.mxu0 0.0
  %324 = vmatprep.subr.mxu0 0.0
  %325 = vmatpush1.msra.mxu0 0.0
  %326 = vmatprep.subr.mxu0 0.0
  %327 = vmatpush1.msra.mxu0 0.0
  %328 = vmatprep.subr.mxu0 0.0
  %329 = vmatpush1.msra.mxu0 0.0
  %330 = vmatprep.subr.mxu0 0.0
  %331 = vmatpush1.msra.mxu0 0.0
  %332 = vmatprep.subr.mxu0 0.0
  %333 = vmatpush1.msra.mxu0 0.0
  %334 = vmatprep.subr.mxu0 0.0
  %335 = vmatpush1.msra.mxu0 0.0
  %336 = vmatprep.subr.mxu0 0.0
  %337 = vmatpush1.msra.mxu0 0.0
  %338 = vmatprep.subr.mxu0 0.0
  %339 = vmatpush1.msra.mxu0 0.0
  %340 = vmatprep.mubr.f32.mxu0 0.0
  %341 = vmatmul.mubr.f32.gmra.mrb[0].mxu0 %v70
  %v342 = vpop.f32.mrb[0].mxu0
  %v343 = vadd.f32 %v43, %v342
  %v344 = vpop.f32.mrb[0].mxu0
  %v345 = vadd.f32 %v43, %v344
  %346 = vmatprep.mubr.f32.mxu0 0.0
  %347 = vmatmul.mubr.f32.gmra.mrb[0].mxu0 %v73
  %v348 = vpop.f32.mrb[0].mxu0
  %v349 = vadd.f32 %v48, %v348
  %v350 = vpop.f32.mrb[0].mxu0
  %v351 = vadd.f32 %v48, %v350
  %352 = vmatprep.mubr.f32.mxu0 0.0
  %353 = vmatmul.mubr.f32.gmra.mrb[0].mxu0 %v76
  %v354 = vpop.f32.mrb[0].mxu0
  %v355 = vadd.f32 %v53, %v354
  %v356 = vpop.f32.mrb[0].mxu0
  %v357 = vadd.f32 %v53, %v356
  %358 = vmatprep.mubr.f32.mxu0 0.0
  %359 = vmatmul.mubr.f32.gmra.mrb[0].mxu0 %v79
  %v360 = vpop.f32.mrb[0].mxu0
  %v361 = vadd.f32 %v58, %v360
  %v362 = vpop.f32.mrb[0].mxu0
  %v363 = vadd.f32 %v58, %v362
  %364 = vdwg.mxu0
  %365 = vmatprep.subr.mxu0 %v96
  %366 = vmatpush1.msra.mxu0 %v94
  %367 = vmatprep.subr.mxu0 0.0
  %368 = vmatpush1.msra.mxu0 0.0
  %369 = vmatprep.subr.mxu0 0.0
  %370 = vmatpush1.msra.mxu0 0.0
  %371 = vmatprep.subr.mxu0 0.0
  %372 = vmatpush1.msra.mxu0 0.0
  %373 = vmatprep.subr.mxu0 0.0
  %374 = vmatpush1.msra.mxu0 0.0
  %375 = vmatprep.subr.mxu0 0.0
  %376 = vmatpush1.msra.mxu0 0.0
  %377 = vmatprep.subr.mxu0 0.0
  %378 = vmatpush1.msra.mxu0 0.0
  %379 = vmatprep.subr.mxu0 0.0
  %380 = vmatpush1.msra.mxu0 0.0
  %381 = vmatprep.subr.mxu0 0.0
  %382 = vmatpush1.msra.mxu0 0.0
  %383 = vmatprep.subr.mxu0 0.0
  %384 = vmatpush1.msra.mxu0 0.0
  %385 = vmatprep.subr.mxu0 0.0
  %386 = vmatpush1.msra.mxu0 0.0
  %387 = vmatprep.subr.mxu0 0.0
  %388 = vmatpush1.msra.mxu0 0.0
  %389 = vmatprep.subr.mxu0 0.0
  %390 = vmatpush1.msra.mxu0 0.0
  %391 = vmatprep.subr.mxu0 0.0
  %392 = vmatpush1.msra.mxu0 0.0
  %393 = vmatprep.subr.mxu0 0.0
  %394 = vmatpush1.msra.mxu0 0.0
  %395 = vmatprep.subr.mxu0 0.0
  %396 = vmatpush1.msra.mxu0 0.0
  %397 = vmatprep.subr.mxu0 0.0
  %398 = vmatpush1.msra.mxu0 0.0
  %399 = vmatprep.subr.mxu0 0.0
  %400 = vmatpush1.msra.mxu0 0.0
  %401 = vmatprep.subr.mxu0 0.0
  %402 = vmatpush1.msra.mxu0 0.0
  %403 = vmatprep.subr.mxu0 0.0
  %404 = vmatpush1.msra.mxu0 0.0
  %405 = vmatprep.subr.mxu0 0.0
  %406 = vmatpush1.msra.mxu0 0.0
  %407 = vmatprep.subr.mxu0 0.0
  %408 = vmatpush1.msra.mxu0 0.0
  %409 = vmatprep.subr.mxu0 0.0
  %410 = vmatpush1.msra.mxu0 0.0
  %411 = vmatprep.subr.mxu0 0.0
  %412 = vmatpush1.msra.mxu0 0.0
  %413 = vmatprep.subr.mxu0 0.0
  %414 = vmatpush1.msra.mxu0 0.0
  %415 = vmatprep.subr.mxu0 0.0
  %416 = vmatpush1.msra.mxu0 0.0
  %417 = vmatprep.subr.mxu0 0.0
  %418 = vmatpush1.msra.mxu0 0.0
  %419 = vmatprep.subr.mxu0 0.0
  %420 = vmatpush1.msra.mxu0 0.0
  %421 = vmatprep.subr.mxu0 0.0
  %422 = vmatpush1.msra.mxu0 0.0
  %423 = vmatprep.subr.mxu0 0.0
  %424 = vmatpush1.msra.mxu0 0.0
  %425 = vmatprep.subr.mxu0 0.0
  %426 = vmatpush1.msra.mxu0 0.0
  %427 = vmatprep.subr.mxu0 0.0
  %428 = vmatpush1.msra.mxu0 0.0
  %429 = vmatprep.mubr.f32.mxu0 0.0
  %430 = vmatmul.mubr.f32.gmra.mrb[0].mxu0 %v70
  %v431 = vpop.f32.mrb[0].mxu0
  %v432 = vadd.f32 %v43, %v431
  %v433 = vpop.f32.mrb[0].mxu0
  %v434 = vadd.f32 %v43, %v433
  %435 = vmatprep.mubr.f32.mxu0 0.0
  %436 = vmatmul.mubr.f32.gmra.mrb[0].mxu0 %v73
  %v437 = vpop.f32.mrb[0].mxu0
  %v438 = vadd.f32 %v48, %v437
  %v439 = vpop.f32.mrb[0].mxu0
  %v440 = vadd.f32 %v48, %v439
  %441 = vmatprep.mubr.f32.mxu0 0.0
  %442 = vmatmul.mubr.f32.gmra.mrb[0].mxu0 %v76
  %v443 = vpop.f32.mrb[0].mxu0
  %v444 = vadd.f32 %v53, %v443
  %v445 = vpop.f32.mrb[0].mxu0
  %v446 = vadd.f32 %v53, %v445
  %447 = vmatprep.mubr.f32.mxu0 0.0
  %448 = vmatmul.mubr.f32.gmra.mrb[0].mxu0 %v79
  %v449 = vpop.f32.mrb[0].mxu0
  %v450 = vadd.f32 %v58, %v449
  %v451 = vpop.f32.mrb[0].mxu0
  %v452 = vadd.f32 %v58, %v451
  %453 = vdwg.mxu0
  %v454 = vtanh.pop %v165
  %v455 = vtanh.pop %v167
  %v456 = vtanh.pop %v254
  %v457 = vtanh.pop %v256
  %v458 = vtanh.pop %v343
  %v459 = vtanh.pop %v345
  %v460 = vtanh.pop %v432
  %v461 = vtanh.pop %v434
  %v462 = vtanh.pop %v171
  %v463 = vtanh.pop %v173
  %v464 = vtanh.pop %v260
  %v465 = vtanh.pop %v262
  %v466 = vtanh.pop %v349
  %v467 = vtanh.pop %v351
  %v468 = vtanh.pop %v438
  %v469 = vtanh.pop %v440
  %v470 = vtanh.pop %v177
  %v471 = vtanh.pop %v179
  %v472 = vtanh.pop %v266
  %v473 = vtanh.pop %v268
  %v474 = vtanh.pop %v355
  %v475 = vtanh.pop %v357
  %v476 = vtanh.pop %v444
  %v477 = vtanh.pop %v446
  %v478 = vtanh.pop %v183
  %v479 = vtanh.pop %v185
  %v480 = vtanh.pop %v272
  %v481 = vtanh.pop %v274
  %v482 = vtanh.pop %v361
  %v483 = vtanh.pop %v363
  %v484 = vtanh.pop %v450
  %v485 = vtanh.pop %v452
  %v486 = vld [vmem:[%s3] sm:$0xff]
  %v487 = vld [vmem:[%s3 + $0x8] sm:$0xff]
  %v488 = vld [vmem:[%s3 + $0x10] sm:$0xff]
  %v489 = vld [vmem:[%s3 + $0x18] sm:$0xff]
  %v490 = vld [vmem:[%s4] sm:$0xff]
  %v491 = vld [vmem:[%s4 + $0x8] sm:$0xff]
  %v492 = vld [vmem:[%s4 + $0x10] sm:$0xff]
  %v493 = vld [vmem:[%s4 + $0x18] sm:$0xff]
  %495 = vset.pattern.permute.xlu0 0
  %496 = vperm.xlu0 %495, %v490
  %v497 = vpop.permute.xlu0 %496
  %500 = vset.pattern.permute.xlu0 0
  %501 = vperm.xlu0 %500, %v491
  %v502 = vpop.permute.xlu0 %501
  %505 = vset.pattern.permute.xlu0 0
  %506 = vperm.xlu0 %505, %v492
  %v507 = vpop.permute.xlu0 %506
  %510 = vset.pattern.permute.xlu0 0
  %511 = vperm.xlu0 %510, %v493
  %v512 = vpop.permute.xlu0 %511
  %vm514 = vcmask 261120
  %v516 = vsel %vm514, %v486, 0
  %v519 = vsel %vm514, %v487, 0
  %v522 = vsel %vm514, %v488, 0
  %v525 = vsel %vm514, %v489, 0
  %527 = vmatprep.subr.mxu0 %v455
  %528 = vmatpush1.msra.mxu0 %v454
  %529 = vmatprep.subr.mxu0 %v463
  %530 = vmatpush1.msra.mxu0 %v462
  %531 = vmatprep.subr.mxu0 %v471
  %532 = vmatpush1.msra.mxu0 %v470
  %533 = vmatprep.subr.mxu0 %v479
  %534 = vmatpush1.msra.mxu0 %v478
  %535 = vmatprep.subr.mxu0 0.0
  %536 = vmatpush1.msra.mxu0 0.0
  %537 = vmatprep.subr.mxu0 0.0
  %538 = vmatpush1.msra.mxu0 0.0
  %539 = vmatprep.subr.mxu0 0.0
  %540 = vmatpush1.msra.mxu0 0.0
  %541 = vmatprep.subr.mxu0 0.0
  %542 = vmatpush1.msra.mxu0 0.0
  %543 = vmatprep.subr.mxu0 0.0
  %544 = vmatpush1.msra.mxu0 0.0
  %545 = vmatprep.subr.mxu0 0.0
  %546 = vmatpush1.msra.mxu0 0.0
  %547 = vmatprep.subr.mxu0 0.0
  %548 = vmatpush1.msra.mxu0 0.0
  %549 = vmatprep.subr.mxu0 0.0
  %550 = vmatpush1.msra.mxu0 0.0
  %551 = vmatprep.subr.mxu0 0.0
  %552 = vmatpush1.msra.mxu0 0.0
  %553 = vmatprep.subr.mxu0 0.0
  %554 = vmatpush1.msra.mxu0 0.0
  %555 = vmatprep.subr.mxu0 0.0
  %556 = vmatpush1.msra.mxu0 0.0
  %557 = vmatprep.subr.mxu0 0.0
  %558 = vmatpush1.msra.mxu0 0.0
  %559 = vmatprep.subr.mxu0 0.0
  %560 = vmatpush1.msra.mxu0 0.0
  %561 = vmatprep.subr.mxu0 0.0
  %562 = vmatpush1.msra.mxu0 0.0
  %563 = vmatprep.subr.mxu0 0.0
  %564 = vmatpush1.msra.mxu0 0.0
  %565 = vmatprep.subr.mxu0 0.0
  %566 = vmatpush1.msra.mxu0 0.0
  %567 = vmatprep.subr.mxu0 0.0
  %568 = vmatpush1.msra.mxu0 0.0
  %569 = vmatprep.subr.mxu0 0.0
  %570 = vmatpush1.msra.mxu0 0.0
  %571 = vmatprep.subr.mxu0 0.0
  %572 = vmatpush1.msra.mxu0 0.0
  %573 = vmatprep.subr.mxu0 0.0
  %574 = vmatpush1.msra.mxu0 0.0
  %575 = vmatprep.subr.mxu0 0.0
  %576 = vmatpush1.msra.mxu0 0.0
  %577 = vmatprep.subr.mxu0 0.0
  %578 = vmatpush1.msra.mxu0 0.0
  %579 = vmatprep.subr.mxu0 0.0
  %580 = vmatpush1.msra.mxu0 0.0
  %581 = vmatprep.subr.mxu0 0.0
  %582 = vmatpush1.msra.mxu0 0.0
  %583 = vmatprep.subr.mxu0 0.0
  %584 = vmatpush1.msra.mxu0 0.0
  %585 = vmatprep.subr.mxu0 0.0
  %586 = vmatpush1.msra.mxu0 0.0
  %587 = vmatprep.subr.mxu0 0.0
  %588 = vmatpush1.msra.mxu0 0.0
  %589 = vmatprep.subr.mxu0 0.0
  %590 = vmatpush1.msra.mxu0 0.0
  %591 = vmatprep.mubr.f32.mxu0 0.0
  %592 = vmatmul.mubr.f32.gmra.mrb[0].mxu0 %v516
  %v593 = vpop.f32.mrb[0].mxu0
  %v594 = vadd.f32 %v497, %v593
  %v595 = vpop.f32.mrb[0].mxu0
  %v596 = vadd.f32 %v497, %v595
  %597 = vmatprep.mubr.f32.mxu0 0.0
  %598 = vmatmul.mubr.f32.gmra.mrb[0].mxu0 %v519
  %v599 = vpop.f32.mrb[0].mxu0
  %v600 = vadd.f32 %v502, %v599
  %v601 = vpop.f32.mrb[0].mxu0
  %v602 = vadd.f32 %v502, %v601
  %603 = vmatprep.mubr.f32.mxu0 0.0
  %604 = vmatmul.mubr.f32.gmra.mrb[0].mxu0 %v522
  %v605 = vpop.f32.mrb[0].mxu0
  %v606 = vadd.f32 %v507, %v605
  %v607 = vpop.f32.mrb[0].mxu0
  %v608 = vadd.f32 %v507, %v607
  %609 = vmatprep.mubr.f32.mxu0 0.0
  %610 = vmatmul.mubr.f32.gmra.mrb[0].mxu0 %v525
  %v611 = vpop.f32.mrb[0].mxu0
  %v612 = vadd.f32 %v512, %v611
  %v613 = vpop.f32.mrb[0].mxu0
  %v614 = vadd.f32 %v512, %v613
  %615 = vdwg.mxu0
  %616 = vmatprep.subr.mxu0 %v457
  %617 = vmatpush1.msra.mxu0 %v456
  %618 = vmatprep.subr.mxu0 %v465
  %619 = vmatpush1.msra.mxu0 %v464
  %620 = vmatprep.subr.mxu0 %v473
  %621 = vmatpush1.msra.mxu0 %v472
  %622 = vmatprep.subr.mxu0 %v481
  %623 = vmatpush1.msra.mxu0 %v480
  %624 = vmatprep.subr.mxu0 0.0
  %625 = vmatpush1.msra.mxu0 0.0
  %626 = vmatprep.subr.mxu0 0.0
  %627 = vmatpush1.msra.mxu0 0.0
  %628 = vmatprep.subr.mxu0 0.0
  %629 = vmatpush1.msra.mxu0 0.0
  %630 = vmatprep.subr.mxu0 0.0
  %631 = vmatpush1.msra.mxu0 0.0
  %632 = vmatprep.subr.mxu0 0.0
  %633 = vmatpush1.msra.mxu0 0.0
  %634 = vmatprep.subr.mxu0 0.0
  %635 = vmatpush1.msra.mxu0 0.0
  %636 = vmatprep.subr.mxu0 0.0
  %637 = vmatpush1.msra.mxu0 0.0
  %638 = vmatprep.subr.mxu0 0.0
  %639 = vmatpush1.msra.mxu0 0.0
  %640 = vmatprep.subr.mxu0 0.0
  %641 = vmatpush1.msra.mxu0 0.0
  %642 = vmatprep.subr.mxu0 0.0
  %643 = vmatpush1.msra.mxu0 0.0
  %644 = vmatprep.subr.mxu0 0.0
  %645 = vmatpush1.msra.mxu0 0.0
  %646 = vmatprep.subr.mxu0 0.0
  %647 = vmatpush1.msra.mxu0 0.0
  %648 = vmatprep.subr.mxu0 0.0
  %649 = vmatpush1.msra.mxu0 0.0
  %650 = vmatprep.subr.mxu0 0.0
  %651 = vmatpush1.msra.mxu0 0.0
  %652 = vmatprep.subr.mxu0 0.0
  %653 = vmatpush1.msra.mxu0 0.0
  %654 = vmatprep.subr.mxu0 0.0
  %655 = vmatpush1.msra.mxu0 0.0
  %656 = vmatprep.subr.mxu0 0.0
  %657 = vmatpush1.msra.mxu0 0.0
  %658 = vmatprep.subr.mxu0 0.0
  %659 = vmatpush1.msra.mxu0 0.0
  %660 = vmatprep.subr.mxu0 0.0
  %661 = vmatpush1.msra.mxu0 0.0
  %662 = vmatprep.subr.mxu0 0.0
  %663 = vmatpush1.msra.mxu0 0.0
  %664 = vmatprep.subr.mxu0 0.0
  %665 = vmatpush1.msra.mxu0 0.0
  %666 = vmatprep.subr.mxu0 0.0
  %667 = vmatpush1.msra.mxu0 0.0
  %668 = vmatprep.subr.mxu0 0.0
  %669 = vmatpush1.msra.mxu0 0.0
  %670 = vmatprep.subr.mxu0 0.0
  %671 = vmatpush1.msra.mxu0 0.0
  %672 = vmatprep.subr.mxu0 0.0
  %673 = vmatpush1.msra.mxu0 0.0
  %674 = vmatprep.subr.mxu0 0.0
  %675 = vmatpush1.msra.mxu0 0.0
  %676 = vmatprep.subr.mxu0 0.0
  %677 = vmatpush1.msra.mxu0 0.0
  %678 = vmatprep.subr.mxu0 0.0
  %679 = vmatpush1.msra.mxu0 0.0
  %680 = vmatprep.mubr.f32.mxu0 0.0
  %681 = vmatmul.mubr.f32.gmra.mrb[0].mxu0 %v516
  %v682 = vpop.f32.mrb[0].mxu0
  %v683 = vadd.f32 %v497, %v682
  %v684 = vpop.f32.mrb[0].mxu0
  %v685 = vadd.f32 %v497, %v684
  %686 = vmatprep.mubr.f32.mxu0 0.0
  %687 = vmatmul.mubr.f32.gmra.mrb[0].mxu0 %v519
  %v688 = vpop.f32.mrb[0].mxu0
  %v689 = vadd.f32 %v502, %v688
  %v690 = vpop.f32.mrb[0].mxu0
  %v691 = vadd.f32 %v502, %v690
  %692 = vmatprep.mubr.f32.mxu0 0.0
  %693 = vmatmul.mubr.f32.gmra.mrb[0].mxu0 %v522
  %v694 = vpop.f32.mrb[0].mxu0
  %v695 = vadd.f32 %v507, %v694
  %v696 = vpop.f32.mrb[0].mxu0
  %v697 = vadd.f32 %v507, %v696
  %698 = vmatprep.mubr.f32.mxu0 0.0
  %699 = vmatmul.mubr.f32.gmra.mrb[0].mxu0 %v525
  %v700 = vpop.f32.mrb[0].mxu0
  %v701 = vadd.f32 %v512, %v700
  %v702 = vpop.f32.mrb[0].mxu0
  %v703 = vadd.f32 %v512, %v702
  %704 = vdwg.mxu0
  %705 = vmatprep.subr.mxu0 %v459
  %706 = vmatpush1.msra.mxu0 %v458
  %707 = vmatprep.subr.mxu0 %v467
  %708 = vmatpush1.msra.mxu0 %v466
  %709 = vmatprep.subr.mxu0 %v475
  %710 = vmatpush1.msra.mxu0 %v474
  %711 = vmatprep.subr.mxu0 %v483
  %712 = vmatpush1.msra.mxu0 %v482
  %713 = vmatprep.subr.mxu0 0.0
  %714 = vmatpush1.msra.mxu0 0.0
  %715 = vmatprep.subr.mxu0 0.0
  %716 = vmatpush1.msra.mxu0 0.0
  %717 = vmatprep.subr.mxu0 0.0
  %718 = vmatpush1.msra.mxu0 0.0
  %719 = vmatprep.subr.mxu0 0.0
  %720 = vmatpush1.msra.mxu0 0.0
  %721 = vmatprep.subr.mxu0 0.0
  %722 = vmatpush1.msra.mxu0 0.0
  %723 = vmatprep.subr.mxu0 0.0
  %724 = vmatpush1.msra.mxu0 0.0
  %725 = vmatprep.subr.mxu0 0.0
  %726 = vmatpush1.msra.mxu0 0.0
  %727 = vmatprep.subr.mxu0 0.0
  %728 = vmatpush1.msra.mxu0 0.0
  %729 = vmatprep.subr.mxu0 0.0
  %730 = vmatpush1.msra.mxu0 0.0
  %731 = vmatprep.subr.mxu0 0.0
  %732 = vmatpush1.msra.mxu0 0.0
  %733 = vmatprep.subr.mxu0 0.0
  %734 = vmatpush1.msra.mxu0 0.0
  %735 = vmatprep.subr.mxu0 0.0
  %736 = vmatpush1.msra.mxu0 0.0
  %737 = vmatprep.subr.mxu0 0.0
  %738 = vmatpush1.msra.mxu0 0.0
  %739 = vmatprep.subr.mxu0 0.0
  %740 = vmatpush1.msra.mxu0 0.0
  %741 = vmatprep.subr.mxu0 0.0
  %742 = vmatpush1.msra.mxu0 0.0
  %743 = vmatprep.subr.mxu0 0.0
  %744 = vmatpush1.msra.mxu0 0.0
  %745 = vmatprep.subr.mxu0 0.0
  %746 = vmatpush1.msra.mxu0 0.0
  %747 = vmatprep.subr.mxu0 0.0
  %748 = vmatpush1.msra.mxu0 0.0
  %749 = vmatprep.subr.mxu0 0.0
  %750 = vmatpush1.msra.mxu0 0.0
  %751 = vmatprep.subr.mxu0 0.0
  %752 = vmatpush1.msra.mxu0 0.0
  %753 = vmatprep.subr.mxu0 0.0
  %754 = vmatpush1.msra.mxu0 0.0
  %755 = vmatprep.subr.mxu0 0.0
  %756 = vmatpush1.msra.mxu0 0.0
  %757 = vmatprep.subr.mxu0 0.0
  %758 = vmatpush1.msra.mxu0 0.0
  %759 = vmatprep.subr.mxu0 0.0
  %760 = vmatpush1.msra.mxu0 0.0
  %761 = vmatprep.subr.mxu0 0.0
  %762 = vmatpush1.msra.mxu0 0.0
  %763 = vmatprep.subr.mxu0 0.0
  %764 = vmatpush1.msra.mxu0 0.0
  %765 = vmatprep.subr.mxu0 0.0
  %766 = vmatpush1.msra.mxu0 0.0
  %767 = vmatprep.subr.mxu0 0.0
  %768 = vmatpush1.msra.mxu0 0.0
  %769 = vmatprep.mubr.f32.mxu0 0.0
  %770 = vmatmul.mubr.f32.gmra.mrb[0].mxu0 %v516
  %v771 = vpop.f32.mrb[0].mxu0
  %v772 = vadd.f32 %v497, %v771
  %v773 = vpop.f32.mrb[0].mxu0
  %v774 = vadd.f32 %v497, %v773
  %775 = vmatprep.mubr.f32.mxu0 0.0
  %776 = vmatmul.mubr.f32.gmra.mrb[0].mxu0 %v519
  %v777 = vpop.f32.mrb[0].mxu0
  %v778 = vadd.f32 %v502, %v777
  %v779 = vpop.f32.mrb[0].mxu0
  %v780 = vadd.f32 %v502, %v779
  %781 = vmatprep.mubr.f32.mxu0 0.0
  %782 = vmatmul.mubr.f32.gmra.mrb[0].mxu0 %v522
  %v783 = vpop.f32.mrb[0].mxu0
  %v784 = vadd.f32 %v507, %v783
  %v785 = vpop.f32.mrb[0].mxu0
  %v786 = vadd.f32 %v507, %v785
  %787 = vmatprep.mubr.f32.mxu0 0.0
  %788 = vmatmul.mubr.f32.gmra.mrb[0].mxu0 %v525
  %v789 = vpop.f32.mrb[0].mxu0
  %v790 = vadd.f32 %v512, %v789
  %v791 = vpop.f32.mrb[0].mxu0
  %v792 = vadd.f32 %v512, %v791
  %793 = vdwg.mxu0
  %794 = vmatprep.subr.mxu0 %v461
  %795 = vmatpush1.msra.mxu0 %v460
  %796 = vmatprep.subr.mxu0 %v469
  %797 = vmatpush1.msra.mxu0 %v468
  %798 = vmatprep.subr.mxu0 %v477
  %799 = vmatpush1.msra.mxu0 %v476
  %800 = vmatprep.subr.mxu0 %v485
  %801 = vmatpush1.msra.mxu0 %v484
  %802 = vmatprep.subr.mxu0 0.0
  %803 = vmatpush1.msra.mxu0 0.0
  %804 = vmatprep.subr.mxu0 0.0
  %805 = vmatpush1.msra.mxu0 0.0
  %806 = vmatprep.subr.mxu0 0.0
  %807 = vmatpush1.msra.mxu0 0.0
  %808 = vmatprep.subr.mxu0 0.0
  %809 = vmatpush1.msra.mxu0 0.0
  %810 = vmatprep.subr.mxu0 0.0
  %811 = vmatpush1.msra.mxu0 0.0
  %812 = vmatprep.subr.mxu0 0.0
  %813 = vmatpush1.msra.mxu0 0.0
  %814 = vmatprep.subr.mxu0 0.0
  %815 = vmatpush1.msra.mxu0 0.0
  %816 = vmatprep.subr.mxu0 0.0
  %817 = vmatpush1.msra.mxu0 0.0
  %818 = vmatprep.subr.mxu0 0.0
  %819 = vmatpush1.msra.mxu0 0.0
  %820 = vmatprep.subr.mxu0 0.0
  %821 = vmatpush1.msra.mxu0 0.0
  %822 = vmatprep.subr.mxu0 0.0
  %823 = vmatpush1.msra.mxu0 0.0
  %824 = vmatprep.subr.mxu0 0.0
  %825 = vmatpush1.msra.mxu0 0.0
  %826 = vmatprep.subr.mxu0 0.0
  %827 = vmatpush1.msra.mxu0 0.0
  %828 = vmatprep.subr.mxu0 0.0
  %829 = vmatpush1.msra.mxu0 0.0
  %830 = vmatprep.subr.mxu0 0.0
  %831 = vmatpush1.msra.mxu0 0.0
  %832 = vmatprep.subr.mxu0 0.0
  %833 = vmatpush1.msra.mxu0 0.0
  %834 = vmatprep.subr.mxu0 0.0
  %835 = vmatpush1.msra.mxu0 0.0
  %836 = vmatprep.subr.mxu0 0.0
  %837 = vmatpush1.msra.mxu0 0.0
  %838 = vmatprep.subr.mxu0 0.0
  %839 = vmatpush1.msra.mxu0 0.0
  %840 = vmatprep.subr.mxu0 0.0
  %841 = vmatpush1.msra.mxu0 0.0
  %842 = vmatprep.subr.mxu0 0.0
  %843 = vmatpush1.msra.mxu0 0.0
  %844 = vmatprep.subr.mxu0 0.0
  %845 = vmatpush1.msra.mxu0 0.0
  %846 = vmatprep.subr.mxu0 0.0
  %847 = vmatpush1.msra.mxu0 0.0
  %848 = vmatprep.subr.mxu0 0.0
  %849 = vmatpush1.msra.mxu0 0.0
  %850 = vmatprep.subr.mxu0 0.0
  %851 = vmatpush1.msra.mxu0 0.0
  %852 = vmatprep.subr.mxu0 0.0
  %853 = vmatpush1.msra.mxu0 0.0
  %854 = vmatprep.subr.mxu0 0.0
  %855 = vmatpush1.msra.mxu0 0.0
  %856 = vmatprep.subr.mxu0 0.0
  %857 = vmatpush1.msra.mxu0 0.0
  %858 = vmatprep.mubr.f32.mxu0 0.0
  %859 = vmatmul.mubr.f32.gmra.mrb[0].mxu0 %v516
  %v860 = vpop.f32.mrb[0].mxu0
  %v861 = vadd.f32 %v497, %v860
  %v862 = vpop.f32.mrb[0].mxu0
  %v863 = vadd.f32 %v497, %v862
  %864 = vmatprep.mubr.f32.mxu0 0.0
  %865 = vmatmul.mubr.f32.gmra.mrb[0].mxu0 %v519
  %v866 = vpop.f32.mrb[0].mxu0
  %v867 = vadd.f32 %v502, %v866
  %v868 = vpop.f32.mrb[0].mxu0
  %v869 = vadd.f32 %v502, %v868
  %870 = vmatprep.mubr.f32.mxu0 0.0
  %871 = vmatmul.mubr.f32.gmra.mrb[0].mxu0 %v522
  %v872 = vpop.f32.mrb[0].mxu0
  %v873 = vadd.f32 %v507, %v872
  %v874 = vpop.f32.mrb[0].mxu0
  %v875 = vadd.f32 %v507, %v874
  %876 = vmatprep.mubr.f32.mxu0 0.0
  %877 = vmatmul.mubr.f32.gmra.mrb[0].mxu0 %v525
  %v878 = vpop.f32.mrb[0].mxu0
  %v879 = vadd.f32 %v512, %v878
  %v880 = vpop.f32.mrb[0].mxu0
  %v881 = vadd.f32 %v512, %v880
  %882 = vdwg.mxu0
  %v883 = vtanh.pop %v594
  %v884 = vtanh.pop %v596
  %v885 = vtanh.pop %v683
  %v886 = vtanh.pop %v685
  %v887 = vtanh.pop %v772
  %v888 = vtanh.pop %v774
  %v889 = vtanh.pop %v861
  %v890 = vtanh.pop %v863
  %v891 = vtanh.pop %v600
  %v892 = vtanh.pop %v602
  %v893 = vtanh.pop %v689
  %v894 = vtanh.pop %v691
  %v895 = vtanh.pop %v778
  %v896 = vtanh.pop %v780
  %v897 = vtanh.pop %v867
  %v898 = vtanh.pop %v869
  %v899 = vtanh.pop %v606
  %v900 = vtanh.pop %v608
  %v901 = vtanh.pop %v695
  %v902 = vtanh.pop %v697
  %v903 = vtanh.pop %v784
  %v904 = vtanh.pop %v786
  %v905 = vtanh.pop %v873
  %v906 = vtanh.pop %v875
  %v907 = vtanh.pop %v612
  %v908 = vtanh.pop %v614
  %v909 = vtanh.pop %v701
  %v910 = vtanh.pop %v703
  %v911 = vtanh.pop %v790
  %v912 = vtanh.pop %v792
  %v913 = vtanh.pop %v879
  %v914 = vtanh.pop %v881
  %v915 = vld [vmem:[%s5] sm:$0x1]
  %v916 = vld [vmem:[#allocation2] sm:$0x1]
  %918 = vset.pattern.permute.xlu0 0
  %919 = vperm.xlu0 %918, %v916
  %v920 = vpop.permute.xlu0 %919
  %v922 = vlaneseq
  %v923 = vshrl.u32 %v922, 7
  %v924 = vsub.s32 0, %v923
  %v925 = vrot.slane %v920, %v924
  %v927 = vsel %vm514, %v915, 0
  %929 = vmatprep.subr.mxu0 %v884
  %930 = vmatpush1.msra.mxu0 %v883
  %931 = vmatprep.subr.mxu0 %v892
  %932 = vmatpush1.msra.mxu0 %v891
  %933 = vmatprep.subr.mxu0 %v900
  %934 = vmatpush1.msra.mxu0 %v899
  %935 = vmatprep.subr.mxu0 %v908
  %936 = vmatpush1.msra.mxu0 %v907
  %937 = vmatprep.subr.mxu0 0.0
  %938 = vmatpush1.msra.mxu0 0.0
  %939 = vmatprep.subr.mxu0 0.0
  %940 = vmatpush1.msra.mxu0 0.0
  %941 = vmatprep.subr.mxu0 0.0
  %942 = vmatpush1.msra.mxu0 0.0
  %943 = vmatprep.subr.mxu0 0.0
  %944 = vmatpush1.msra.mxu0 0.0
  %945 = vmatprep.subr.mxu0 0.0
  %946 = vmatpush1.msra.mxu0 0.0
  %947 = vmatprep.subr.mxu0 0.0
  %948 = vmatpush1.msra.mxu0 0.0
  %949 = vmatprep.subr.mxu0 0.0
  %950 = vmatpush1.msra.mxu0 0.0
  %951 = vmatprep.subr.mxu0 0.0
  %952 = vmatpush1.msra.mxu0 0.0
  %953 = vmatprep.subr.mxu0 0.0
  %954 = vmatpush1.msra.mxu0 0.0
  %955 = vmatprep.subr.mxu0 0.0
  %956 = vmatpush1.msra.mxu0 0.0
  %957 = vmatprep.subr.mxu0 0.0
  %958 = vmatpush1.msra.mxu0 0.0
  %959 = vmatprep.subr.mxu0 0.0
  %960 = vmatpush1.msra.mxu0 0.0
  %961 = vmatprep.subr.mxu0 0.0
  %962 = vmatpush1.msra.mxu0 0.0
  %963 = vmatprep.subr.mxu0 0.0
  %964 = vmatpush1.msra.mxu0 0.0
  %965 = vmatprep.subr.mxu0 0.0
  %966 = vmatpush1.msra.mxu0 0.0
  %967 = vmatprep.subr.mxu0 0.0
  %968 = vmatpush1.msra.mxu0 0.0
  %969 = vmatprep.subr.mxu0 0.0
  %970 = vmatpush1.msra.mxu0 0.0
  %971 = vmatprep.subr.mxu0 0.0
  %972 = vmatpush1.msra.mxu0 0.0
  %973 = vmatprep.subr.mxu0 0.0
  %974 = vmatpush1.msra.mxu0 0.0
  %975 = vmatprep.subr.mxu0 0.0
  %976 = vmatpush1.msra.mxu0 0.0
  %977 = vmatprep.subr.mxu0 0.0
  %978 = vmatpush1.msra.mxu0 0.0
  %979 = vmatprep.subr.mxu0 0.0
  %980 = vmatpush1.msra.mxu0 0.0
  %981 = vmatprep.subr.mxu0 0.0
  %982 = vmatpush1.msra.mxu0 0.0
  %983 = vmatprep.subr.mxu0 0.0
  %984 = vmatpush1.msra.mxu0 0.0
  %985 = vmatprep.subr.mxu0 0.0
  %986 = vmatpush1.msra.mxu0 0.0
  %987 = vmatprep.subr.mxu0 0.0
  %988 = vmatpush1.msra.mxu0 0.0
  %989 = vmatprep.subr.mxu0 0.0
  %990 = vmatpush1.msra.mxu0 0.0
  %991 = vmatprep.subr.mxu0 0.0
  %992 = vmatpush1.msra.mxu0 0.0
  %993 = vmatprep.mubr.f32.mxu0 0.0
  %994 = vmatmul.mubr.f32.gmra.mrb[0].mxu0 %v927
  %v995 = vpop.f32.mrb[0].mxu0
  %v996 = vadd.f32 %v925, %v995
  %v997 = vpop.f32.mrb[0].mxu0
  %v998 = vadd.f32 %v925, %v997
  %999 = vdwg.mxu0
  %1000 = vmatprep.subr.mxu0 %v886
  %1001 = vmatpush1.msra.mxu0 %v885
  %1002 = vmatprep.subr.mxu0 %v894
  %1003 = vmatpush1.msra.mxu0 %v893
  %1004 = vmatprep.subr.mxu0 %v902
  %1005 = vmatpush1.msra.mxu0 %v901
  %1006 = vmatprep.subr.mxu0 %v910
  %1007 = vmatpush1.msra.mxu0 %v909
  %1008 = vmatprep.subr.mxu0 0.0
  %1009 = vmatpush1.msra.mxu0 0.0
  %1010 = vmatprep.subr.mxu0 0.0
  %1011 = vmatpush1.msra.mxu0 0.0
  %1012 = vmatprep.subr.mxu0 0.0
  %1013 = vmatpush1.msra.mxu0 0.0
  %1014 = vmatprep.subr.mxu0 0.0
  %1015 = vmatpush1.msra.mxu0 0.0
  %1016 = vmatprep.subr.mxu0 0.0
  %1017 = vmatpush1.msra.mxu0 0.0
  %1018 = vmatprep.subr.mxu0 0.0
  %1019 = vmatpush1.msra.mxu0 0.0
  %1020 = vmatprep.subr.mxu0 0.0
  %1021 = vmatpush1.msra.mxu0 0.0
  %1022 = vmatprep.subr.mxu0 0.0
  %1023 = vmatpush1.msra.mxu0 0.0
  %1024 = vmatprep.subr.mxu0 0.0
  %1025 = vmatpush1.msra.mxu0 0.0
  %1026 = vmatprep.subr.mxu0 0.0
  %1027 = vmatpush1.msra.mxu0 0.0
  %1028 = vmatprep.subr.mxu0 0.0
  %1029 = vmatpush1.msra.mxu0 0.0
  %1030 = vmatprep.subr.mxu0 0.0
  %1031 = vmatpush1.msra.mxu0 0.0
  %1032 = vmatprep.subr.mxu0 0.0
  %1033 = vmatpush1.msra.mxu0 0.0
  %1034 = vmatprep.subr.mxu0 0.0
  %1035 = vmatpush1.msra.mxu0 0.0
  %1036 = vmatprep.subr.mxu0 0.0
  %1037 = vmatpush1.msra.mxu0 0.0
  %1038 = vmatprep.subr.mxu0 0.0
  %1039 = vmatpush1.msra.mxu0 0.0
  %1040 = vmatprep.subr.mxu0 0.0
  %1041 = vmatpush1.msra.mxu0 0.0
  %1042 = vmatprep.subr.mxu0 0.0
  %1043 = vmatpush1.msra.mxu0 0.0
  %1044 = vmatprep.subr.mxu0 0.0
  %1045 = vmatpush1.msra.mxu0 0.0
  %1046 = vmatprep.subr.mxu0 0.0
  %1047 = vmatpush1.msra.mxu0 0.0
  %1048 = vmatprep.subr.mxu0 0.0
  %1049 = vmatpush1.msra.mxu0 0.0
  %1050 = vmatprep.subr.mxu0 0.0
  %1051 = vmatpush1.msra.mxu0 0.0
  %1052 = vmatprep.subr.mxu0 0.0
  %1053 = vmatpush1.msra.mxu0 0.0
  %1054 = vmatprep.subr.mxu0 0.0
  %1055 = vmatpush1.msra.mxu0 0.0
  %1056 = vmatprep.subr.mxu0 0.0
  %1057 = vmatpush1.msra.mxu0 0.0
  %1058 = vmatprep.subr.mxu0 0.0
  %1059 = vmatpush1.msra.mxu0 0.0
  %1060 = vmatprep.subr.mxu0 0.0
  %1061 = vmatpush1.msra.mxu0 0.0
  %1062 = vmatprep.subr.mxu0 0.0
  %1063 = vmatpush1.msra.mxu0 0.0
  %1064 = vmatprep.mubr.f32.mxu0 0.0
  %1065 = vmatmul.mubr.f32.gmra.mrb[0].mxu0 %v927
  %v1066 = vpop.f32.mrb[0].mxu0
  %v1067 = vadd.f32 %v925, %v1066
  %v1068 = vpop.f32.mrb[0].mxu0
  %v1069 = vadd.f32 %v925, %v1068
  %1070 = vdwg.mxu0
  %1071 = vmatprep.subr.mxu0 %v888
  %1072 = vmatpush1.msra.mxu0 %v887
  %1073 = vmatprep.subr.mxu0 %v896
  %1074 = vmatpush1.msra.mxu0 %v895
  %1075 = vmatprep.subr.mxu0 %v904
  %1076 = vmatpush1.msra.mxu0 %v903
  %1077 = vmatprep.subr.mxu0 %v912
  %1078 = vmatpush1.msra.mxu0 %v911
  %1079 = vmatprep.subr.mxu0 0.0
  %1080 = vmatpush1.msra.mxu0 0.0
  %1081 = vmatprep.subr.mxu0 0.0
  %1082 = vmatpush1.msra.mxu0 0.0
  %1083 = vmatprep.subr.mxu0 0.0
  %1084 = vmatpush1.msra.mxu0 0.0
  %1085 = vmatprep.subr.mxu0 0.0
  %1086 = vmatpush1.msra.mxu0 0.0
  %1087 = vmatprep.subr.mxu0 0.0
  %1088 = vmatpush1.msra.mxu0 0.0
  %1089 = vmatprep.subr.mxu0 0.0
  %1090 = vmatpush1.msra.mxu0 0.0
  %1091 = vmatprep.subr.mxu0 0.0
  %1092 = vmatpush1.msra.mxu0 0.0
  %1093 = vmatprep.subr.mxu0 0.0
  %1094 = vmatpush1.msra.mxu0 0.0
  %1095 = vmatprep.subr.mxu0 0.0
  %1096 = vmatpush1.msra.mxu0 0.0
  %1097 = vmatprep.subr.mxu0 0.0
  %1098 = vmatpush1.msra.mxu0 0.0
  %1099 = vmatprep.subr.mxu0 0.0
  %1100 = vmatpush1.msra.mxu0 0.0
  %1101 = vmatprep.subr.mxu0 0.0
  %1102 = vmatpush1.msra.mxu0 0.0
  %1103 = vmatprep.subr.mxu0 0.0
  %1104 = vmatpush1.msra.mxu0 0.0
  %1105 = vmatprep.subr.mxu0 0.0
  %1106 = vmatpush1.msra.mxu0 0.0
  %1107 = vmatprep.subr.mxu0 0.0
  %1108 = vmatpush1.msra.mxu0 0.0
  %1109 = vmatprep.subr.mxu0 0.0
  %1110 = vmatpush1.msra.mxu0 0.0
  %1111 = vmatprep.subr.mxu0 0.0
  %1112 = vmatpush1.msra.mxu0 0.0
  %1113 = vmatprep.subr.mxu0 0.0
  %1114 = vmatpush1.msra.mxu0 0.0
  %1115 = vmatprep.subr.mxu0 0.0
  %1116 = vmatpush1.msra.mxu0 0.0
  %1117 = vmatprep.subr.mxu0 0.0
  %1118 = vmatpush1.msra.mxu0 0.0
  %1119 = vmatprep.subr.mxu0 0.0
  %1120 = vmatpush1.msra.mxu0 0.0
  %1121 = vmatprep.subr.mxu0 0.0
  %1122 = vmatpush1.msra.mxu0 0.0
  %1123 = vmatprep.subr.mxu0 0.0
  %1124 = vmatpush1.msra.mxu0 0.0
  %1125 = vmatprep.subr.mxu0 0.0
  %1126 = vmatpush1.msra.mxu0 0.0
  %1127 = vmatprep.subr.mxu0 0.0
  %1128 = vmatpush1.msra.mxu0 0.0
  %1129 = vmatprep.subr.mxu0 0.0
  %1130 = vmatpush1.msra.mxu0 0.0
  %1131 = vmatprep.subr.mxu0 0.0
  %1132 = vmatpush1.msra.mxu0 0.0
  %1133 = vmatprep.subr.mxu0 0.0
  %1134 = vmatpush1.msra.mxu0 0.0
  %1135 = vmatprep.mubr.f32.mxu0 0.0
  %1136 = vmatmul.mubr.f32.gmra.mrb[0].mxu0 %v927
  %v1137 = vpop.f32.mrb[0].mxu0
  %v1138 = vadd.f32 %v925, %v1137
  %v1139 = vpop.f32.mrb[0].mxu0
  %v1140 = vadd.f32 %v925, %v1139
  %1141 = vdwg.mxu0
  %1142 = vmatprep.subr.mxu0 %v890
  %1143 = vmatpush1.msra.mxu0 %v889
  %1144 = vmatprep.subr.mxu0 %v898
  %1145 = vmatpush1.msra.mxu0 %v897
  %1146 = vmatprep.subr.mxu0 %v906
  %1147 = vmatpush1.msra.mxu0 %v905
  %1148 = vmatprep.subr.mxu0 %v914
  %1149 = vmatpush1.msra.mxu0 %v913
  %1150 = vmatprep.subr.mxu0 0.0
  %1151 = vmatpush1.msra.mxu0 0.0
  %1152 = vmatprep.subr.mxu0 0.0
  %1153 = vmatpush1.msra.mxu0 0.0
  %1154 = vmatprep.subr.mxu0 0.0
  %1155 = vmatpush1.msra.mxu0 0.0
  %1156 = vmatprep.subr.mxu0 0.0
  %1157 = vmatpush1.msra.mxu0 0.0
  %1158 = vmatprep.subr.mxu0 0.0
  %1159 = vmatpush1.msra.mxu0 0.0
  %1160 = vmatprep.subr.mxu0 0.0
  %1161 = vmatpush1.msra.mxu0 0.0
  %1162 = vmatprep.subr.mxu0 0.0
  %1163 = vmatpush1.msra.mxu0 0.0
  %1164 = vmatprep.subr.mxu0 0.0
  %1165 = vmatpush1.msra.mxu0 0.0
  %1166 = vmatprep.subr.mxu0 0.0
  %1167 = vmatpush1.msra.mxu0 0.0
  %1168 = vmatprep.subr.mxu0 0.0
  %1169 = vmatpush1.msra.mxu0 0.0
  %1170 = vmatprep.subr.mxu0 0.0
  %1171 = vmatpush1.msra.mxu0 0.0
  %1172 = vmatprep.subr.mxu0 0.0
  %1173 = vmatpush1.msra.mxu0 0.0
  %1174 = vmatprep.subr.mxu0 0.0
  %1175 = vmatpush1.msra.mxu0 0.0
  %1176 = vmatprep.subr.mxu0 0.0
  %1177 = vmatpush1.msra.mxu0 0.0
  %1178 = vmatprep.subr.mxu0 0.0
  %1179 = vmatpush1.msra.mxu0 0.0
  %1180 = vmatprep.subr.mxu0 0.0
  %1181 = vmatpush1.msra.mxu0 0.0
  %1182 = vmatprep.subr.mxu0 0.0
  %1183 = vmatpush1.msra.mxu0 0.0
  %1184 = vmatprep.subr.mxu0 0.0
  %1185 = vmatpush1.msra.mxu0 0.0
  %1186 = vmatprep.subr.mxu0 0.0
  %1187 = vmatpush1.msra.mxu0 0.0
  %1188 = vmatprep.subr.mxu0 0.0
  %1189 = vmatpush1.msra.mxu0 0.0
  %1190 = vmatprep.subr.mxu0 0.0
  %1191 = vmatpush1.msra.mxu0 0.0
  %1192 = vmatprep.subr.mxu0 0.0
  %1193 = vmatpush1.msra.mxu0 0.0
  %1194 = vmatprep.subr.mxu0 0.0
  %1195 = vmatpush1.msra.mxu0 0.0
  %1196 = vmatprep.subr.mxu0 0.0
  %1197 = vmatpush1.msra.mxu0 0.0
  %1198 = vmatprep.subr.mxu0 0.0
  %1199 = vmatpush1.msra.mxu0 0.0
  %1200 = vmatprep.subr.mxu0 0.0
  %1201 = vmatpush1.msra.mxu0 0.0
  %1202 = vmatprep.subr.mxu0 0.0
  %1203 = vmatpush1.msra.mxu0 0.0
  %1204 = vmatprep.subr.mxu0 0.0
  %1205 = vmatpush1.msra.mxu0 0.0
  %1206 = vmatprep.mubr.f32.mxu0 0.0
  %1207 = vmatmul.mubr.f32.gmra.mrb[0].mxu0 %v927
  %v1208 = vpop.f32.mrb[0].mxu0
  %v1209 = vadd.f32 %v925, %v1208
  %v1210 = vpop.f32.mrb[0].mxu0
  %v1211 = vadd.f32 %v925, %v1210
  %1212 = vdwg.mxu0
  %v1221 = vcombine.low %v996, %v998
  %v1222 = vcombine.low %v1067, %v1069
  %v1223 = vcombine.low %v1138, %v1140
  %v1224 = vcombine.low %v1209, %v1211
  %v1226 = vunpack.c.l.s4 1966171168
  %v1227 = vunpack.c.0.s8 %v1226
  %v1228 = vlaneseq
  %v1229 = vshrl.u32 %v1228, 7
  %v1230 = vsub.s32 %v1227, %v1229
  %v1231 = vrot.slane %v1221, %v1230
  %v1233 = vunpack.c.l.s4 1966171168
  %v1234 = vunpack.c.0.s8 %v1233
  %v1235 = vlaneseq
  %v1236 = vshrl.u32 %v1235, 7
  %v1237 = vsub.s32 %v1234, %v1236
  %v1238 = vrot.slane %v1222, %v1237
  %v1240 = vunpack.c.l.s4 1966171168
  %v1241 = vunpack.c.0.s8 %v1240
  %v1242 = vlaneseq
  %v1243 = vshrl.u32 %v1242, 7
  %v1244 = vsub.s32 %v1241, %v1243
  %v1245 = vrot.slane %v1223, %v1244
  %v1247 = vunpack.c.l.s4 1966171168
  %v1248 = vunpack.c.0.s8 %v1247
  %v1249 = vlaneseq
  %v1250 = vshrl.u32 %v1249, 7
  %v1251 = vsub.s32 %v1248, %v1250
  %v1252 = vrot.slane %v1224, %v1251
  %v1253 = vcombine.low %v1231, %v1238
  %v1254 = vcombine.low %v1245, %v1252
  %v1256 = vunpack.c.l.s4 1966171168
  %v1257 = vunpack.c.0.s8 %v1256
  %v1258 = vlaneseq
  %v1259 = vshrl.u32 %v1258, 7
  %v1260 = vsub.s32 %v1257, %v1259
  %v1261 = vrot.slane %v1253, %v1260
  %v1263 = vunpack.c.l.s4 1966171168
  %v1264 = vunpack.c.0.s8 %v1263
  %v1265 = vlaneseq
  %v1266 = vshrl.u32 %v1265, 7
  %v1267 = vsub.s32 %v1264, %v1266
  %v1268 = vrot.slane %v1254, %v1267
  %v1269 = vcombine.low %v1261, %v1268
  %1271 = vst [vmem:[%s7] sm:$0xff] %v1269
  // Predicated region
  $region30: #{_poisson_sm_forward_impl.1} parent=0 // pred_check
    _
  $region31: #{_poisson_sm_forward_impl.1} parent=0 // pred_check_branch
    %1273 = sbr.rel (0) target = $region33
  $region32: #{_poisson_sm_forward_impl.1} parent=0 // pred_region
    _
  $region33: #{_poisson_sm_forward_impl.1} parent=0 // pred_fallthru
    _
  // Predicated region
  $region34: #{_poisson_sm_forward_impl.1} parent=0 // pred_check
    _
  $region35: #{_poisson_sm_forward_impl.1} parent=0 // pred_check_branch
    %1275 = sbr.rel (0) target = $region37
  $region36: #{_poisson_sm_forward_impl.1} parent=0 // pred_region
    _
  $region37: #{_poisson_sm_forward_impl.1} parent=0 // pred_fallthru
    _

</llo_original>
